<compile_context>
chip_gen: v5e
topology: v5e:2x2
jax: 0.10.0
libtpu: 0.0.40
codegen_flags: <defaults>
</compile_context>

<pallas_src>
import functools

import jax
import jax.numpy as jnp
from jax.experimental import pallas as pl
from jax.experimental.pallas import tpu as pltpu

CIN_PAD = 8  # pad Cin (3) to one sublane tile -> tile-aligned scratch stores


def _conv3x3_fused_kernel(coord_ref, x_ref, w_ref, o_ref, p_ref, *, H, W):
    """Fused im2col + single-matmul 3x3 'same' conv, no bias.

    coord_ref: (2*CIN_PAD, NHW) i32  rows 0..7 = image row index, 8..15 = col index
    x_ref:     (CIN_PAD, NHW)   f32  channel-major input, lanes = (n, h, w) flattened
    w_ref:     (Cout, 9*CIN_PAD) bf16, column k = (dh*3+dw)*CIN_PAD + cin
    o_ref:     (Cout, NHW)      f32  lane-dense output (NHW multiple of 128)
    p_ref:     (9*CIN_PAD, NHW) f32  VMEM scratch holding the im2col patch matrix
    """
    x = x_ref[...]                              # (8, NHW) f32
    nhw = x.shape[1]
    row = coord_ref[0:CIN_PAD, :]               # (8, NHW) i32
    col = coord_ref[CIN_PAD:2 * CIN_PAD, :]     # (8, NHW) i32

    # Build the im2col patch matrix in VMEM: one lane-roll (XLU) + mask (VPU)
    # per tap; every store is a full (8, NHW) f32 tile-aligned slab.
    for dh in range(3):
        for dw in range(3):
            tap = dh * 3 + dw
            off = (dh - 1) * W + (dw - 1)
            # shifted[i] = x[(i + off) mod nhw]; wraparound / cross-image reads
            # only land on positions the validity mask zeroes out.
            shifted = x if off == 0 else pltpu.roll(x, shift=(-off) % nhw, axis=1)
            rr = row + (dh - 1)
            cc = col + (dw - 1)
            valid = (rr >= 0) & (rr < H) & (cc >= 0) & (cc < W)
            p_ref[tap * CIN_PAD:(tap + 1) * CIN_PAD, :] = jnp.where(
                valid, shifted, 0.0).astype(p_ref.dtype)

    # One MXU issue for the whole batch: bf16 x bf16 -> f32 accumulation.
    acc = jnp.dot(w_ref[...], p_ref[...].astype(jnp.bfloat16),
                  preferred_element_type=jnp.float32)
    o_ref[...] = acc.astype(o_ref.dtype)


@jax.jit
def basenet_conv1(x_nchw, w_oihw):
    """BaseNet.forward: 3x3 pad=1 conv, no bias.

    x_nchw: (N, Cin, H, W)     (PyTorch layout)
    w_oihw: (Cout, Cin, 3, 3)  (PyTorch nn.Conv2d weight layout)
    """
    N, Cin, H, W = x_nchw.shape
    Cout, wcin, kh, kw = w_oihw.shape
    assert (kh, kw) == (3, 3) and wcin == Cin and Cin <= CIN_PAD
    HW = H * W
    NHW = N * HW
    K = 9 * CIN_PAD

    # ---- cheap layout plumbing in the wrapper (a few KB each) ----
    # Input: NCHW -> channel-major (CIN_PAD, N*H*W); channels padded 3 -> 8.
    x2 = jnp.pad(x_nchw.astype(jnp.float32),
                 ((0, 0), (0, CIN_PAD - Cin), (0, 0), (0, 0)))
    x2 = x2.transpose(1, 0, 2, 3).reshape(CIN_PAD, NHW)

    # Weights: OIHW -> (Cout, dh, dw, cin_pad) -> (Cout, 72), bf16 at the boundary.
    w2 = jnp.pad(w_oihw, ((0, 0), (0, CIN_PAD - Cin), (0, 0), (0, 0)))
    w2 = w2.transpose(0, 2, 3, 1).reshape(Cout, K).astype(jnp.bfloat16)

    # Per-lane (row, col) image coordinates (pure compile-time constant).
    hw_idx = jnp.arange(NHW, dtype=jnp.int32) % HW
    row = hw_idx // W
    col = hw_idx % W
    coords = jnp.concatenate(
        [jnp.broadcast_to(row, (CIN_PAD, NHW)),
         jnp.broadcast_to(col, (CIN_PAD, NHW))], axis=0).astype(jnp.int32)

    kernel = functools.partial(_conv3x3_fused_kernel, H=H, W=W)

    cost = pl.CostEstimate(
        flops=2 * N * Cout * Cin * 9 * HW,
        transcendentals=0,
        bytes_accessed=x2.size * 4 + coords.size * 4 + w2.size * 2 + Cout * NHW * 4,
    )

    out = pl.pallas_call(
        kernel,
        out_shape=jax.ShapeDtypeStruct((Cout, NHW), jnp.float32),
        grid_spec=pltpu.PrefetchScalarGridSpec(
            num_scalar_prefetch=0,
            grid=(1,),  # whole problem is ~250 KB of VMEM -> one grid step
            in_specs=[
                pl.BlockSpec((2 * CIN_PAD, NHW), lambda i: (0, 0)),
                pl.BlockSpec((CIN_PAD, NHW), lambda i: (0, 0)),
                pl.BlockSpec((Cout, K), lambda i: (0, 0)),
            ],
            out_specs=pl.BlockSpec((Cout, NHW), lambda i: (0, 0)),
            scratch_shapes=[pltpu.VMEM((K, NHW), jnp.float32)],
        ),
        cost_estimate=cost,
    )(coords, x2, w2)

    # (Cout, N*HW) -> (N, Cout, H, W): tiny un-transpose (pure layout plumbing).
    return out.reshape(Cout, N, H, W).transpose(1, 0, 2, 3)


if __name__ == "__main__":
    # BaseNet(growthRate=8, ...): conv1 = Conv2d(3, 16, 3, padding=1, bias=False)
    growthRate = 8
    nChannels = 2 * growthRate
    N, Cin, H, W = 2, 3, 16, 16

    key = jax.random.PRNGKey(0)
    kx, kw = jax.random.split(key)
    x = jax.random.normal(kx, (N, Cin, H, W), dtype=jnp.float32)
    w_oihw = 0.1 * jax.random.normal(kw, (nChannels, Cin, 3, 3), dtype=jnp.float32)

    out = jax.block_until_ready(basenet_conv1(x, w_oihw))
    assert out.shape == (N, nChannels, H, W)

    # Exact-semantics reference: same bf16-rounded operands, f32 accumulation.
    x_b = x.astype(jnp.bfloat16).astype(jnp.float32)
    w_b = w_oihw.astype(jnp.bfloat16).astype(jnp.float32)
    ref_bf16 = jax.lax.conv_general_dilated(
        x_b, w_b, window_strides=(1, 1), padding="SAME",
        dimension_numbers=("NCHW", "OIHW", "NCHW"),
        precision=jax.lax.Precision.HIGHEST)
    assert jnp.allclose(out, ref_bf16, atol=1e-4, rtol=1e-4)

    # Sanity check against the full-f32 conv (loose: kernel feeds the MXU bf16).
    ref_f32 = jax.lax.conv_general_dilated(
        x, w_oihw, window_strides=(1, 1), padding="SAME",
        dimension_numbers=("NCHW", "OIHW", "NCHW"),
        precision=jax.lax.Precision.HIGHEST)
    assert jnp.allclose(out, ref_f32, atol=1e-1, rtol=1e-1)

    print("KERNEL_OK")
</pallas_src>

<mosaic_0001>
module attributes {stable_mosaic.version = 11 : i64} {
  func.func @_conv3x3_fused_kernel(%arg0: i32, %arg1: memref<16x512xi32, #tpu.memory_space<vmem>>, %arg2: memref<8x512xf32, #tpu.memory_space<vmem>>, %arg3: memref<16x72xbf16, #tpu.memory_space<vmem>>, %arg4: memref<16x512xf32, #tpu.memory_space<vmem>>, %arg5: memref<72x512xf32, #tpu.memory_space<vmem>>) attributes {dimension_semantics = [#tpu.dimension_semantics<arbitrary>], iteration_bounds = array<i64: 1>, scalar_prefetch = 0 : i64, scratch_operands = 1 : i64, tpu.core_type = #tpu.core_type<tc>, window_params = [{pipeline_mode = #tpu.pipeline_mode<synchronous>, transform_indices = @transform_0, window_bounds = array<i64: 16, 512>}, {pipeline_mode = #tpu.pipeline_mode<synchronous>, transform_indices = @transform_1, window_bounds = array<i64: 8, 512>}, {pipeline_mode = #tpu.pipeline_mode<synchronous>, transform_indices = @transform_2, window_bounds = array<i64: 16, 72>}, {pipeline_mode = #tpu.pipeline_mode<synchronous>, transform_indices = @transform_3, window_bounds = array<i64: 16, 512>}]} {
    %c0 = arith.constant 0 : index
    %c0_0 = arith.constant 0 : index
    %0 = vector.load %arg2[%c0, %c0_0] : memref<8x512xf32, #tpu.memory_space<vmem>>, vector<8x512xf32>
    %c0_1 = arith.constant 0 : index
    %c0_2 = arith.constant 0 : index
    %1 = vector.load %arg1[%c0_1, %c0_2] : memref<16x512xi32, #tpu.memory_space<vmem>>, vector<8x512xi32>
    %c8 = arith.constant 8 : index
    %c0_3 = arith.constant 0 : index
    %2 = vector.load %arg1[%c8, %c0_3] : memref<16x512xi32, #tpu.memory_space<vmem>>, vector<8x512xi32>
    %c17_i32 = arith.constant 17 : i32
    %3 = tpu.dynamic_rotate %0 by %c17_i32 dim 1 : vector<8x512xf32>, i32 -> vector<8x512xf32>
    %c-1_i32 = arith.constant -1 : i32
    %4 = vector.broadcast %c-1_i32 : i32 to vector<8x512xi32>
    %5 = arith.addi %1, %4 : vector<8x512xi32>
    %c-1_i32_4 = arith.constant -1 : i32
    %6 = vector.broadcast %c-1_i32_4 : i32 to vector<8x512xi32>
    %7 = arith.addi %2, %6 : vector<8x512xi32>
    %c0_i32 = arith.constant 0 : i32
    %8 = vector.broadcast %c0_i32 : i32 to vector<8x512xi32>
    %9 = arith.cmpi sge, %5, %8 : vector<8x512xi32>
    %c16_i32 = arith.constant 16 : i32
    %10 = vector.broadcast %c16_i32 : i32 to vector<8x512xi32>
    %11 = arith.cmpi slt, %5, %10 : vector<8x512xi32>
    %12 = arith.andi %9, %11 : vector<8x512xi1>
    %c0_i32_5 = arith.constant 0 : i32
    %13 = vector.broadcast %c0_i32_5 : i32 to vector<8x512xi32>
    %14 = arith.cmpi sge, %7, %13 : vector<8x512xi32>
    %15 = arith.andi %12, %14 : vector<8x512xi1>
    %c16_i32_6 = arith.constant 16 : i32
    %16 = vector.broadcast %c16_i32_6 : i32 to vector<8x512xi32>
    %17 = arith.cmpi slt, %7, %16 : vector<8x512xi32>
    %18 = arith.andi %15, %17 : vector<8x512xi1>
    %cst = arith.constant 0.000000e+00 : f32
    %19 = vector.broadcast %cst : f32 to vector<8x512xf32>
    %20 = arith.select %18, %3, %19 : vector<8x512xi1>, vector<8x512xf32>
    %c0_7 = arith.constant 0 : index
    %c0_8 = arith.constant 0 : index
    %21 = vector.load %arg5[%c0_7, %c0_8] : memref<72x512xf32, #tpu.memory_space<vmem>>, vector<8x512xf32>
    tpu.vector_store %arg5[%c0_7, %c0_8], %20 {strides = array<i32>} : memref<72x512xf32, #tpu.memory_space<vmem>>, vector<8x512xf32>,
    %c16_i32_9 = arith.constant 16 : i32
    %22 = tpu.dynamic_rotate %0 by %c16_i32_9 dim 1 : vector<8x512xf32>, i32 -> vector<8x512xf32>
    %c-1_i32_10 = arith.constant -1 : i32
    %23 = vector.broadcast %c-1_i32_10 : i32 to vector<8x512xi32>
    %24 = arith.addi %1, %23 : vector<8x512xi32>
    %c0_i32_11 = arith.constant 0 : i32
    %25 = vector.broadcast %c0_i32_11 : i32 to vector<8x512xi32>
    %26 = arith.addi %2, %25 : vector<8x512xi32>
    %c0_i32_12 = arith.constant 0 : i32
    %27 = vector.broadcast %c0_i32_12 : i32 to vector<8x512xi32>
    %28 = arith.cmpi sge, %24, %27 : vector<8x512xi32>
    %c16_i32_13 = arith.constant 16 : i32
    %29 = vector.broadcast %c16_i32_13 : i32 to vector<8x512xi32>
    %30 = arith.cmpi slt, %24, %29 : vector<8x512xi32>
    %31 = arith.andi %28, %30 : vector<8x512xi1>
    %c0_i32_14 = arith.constant 0 : i32
    %32 = vector.broadcast %c0_i32_14 : i32 to vector<8x512xi32>
    %33 = arith.cmpi sge, %26, %32 : vector<8x512xi32>
    %34 = arith.andi %31, %33 : vector<8x512xi1>
    %c16_i32_15 = arith.constant 16 : i32
    %35 = vector.broadcast %c16_i32_15 : i32 to vector<8x512xi32>
    %36 = arith.cmpi slt, %26, %35 : vector<8x512xi32>
    %37 = arith.andi %34, %36 : vector<8x512xi1>
    %cst_16 = arith.constant 0.000000e+00 : f32
    %38 = vector.broadcast %cst_16 : f32 to vector<8x512xf32>
    %39 = arith.select %37, %22, %38 : vector<8x512xi1>, vector<8x512xf32>
    %c8_17 = arith.constant 8 : index
    %c0_18 = arith.constant 0 : index
    %40 = vector.load %arg5[%c8_17, %c0_18] : memref<72x512xf32, #tpu.memory_space<vmem>>, vector<8x512xf32>
    tpu.vector_store %arg5[%c8_17, %c0_18], %39 {strides = array<i32>} : memref<72x512xf32, #tpu.memory_space<vmem>>, vector<8x512xf32>,
    %c15_i32 = arith.constant 15 : i32
    %41 = tpu.dynamic_rotate %0 by %c15_i32 dim 1 : vector<8x512xf32>, i32 -> vector<8x512xf32>
    %c-1_i32_19 = arith.constant -1 : i32
    %42 = vector.broadcast %c-1_i32_19 : i32 to vector<8x512xi32>
    %43 = arith.addi %1, %42 : vector<8x512xi32>
    %c1_i32 = arith.constant 1 : i32
    %44 = vector.broadcast %c1_i32 : i32 to vector<8x512xi32>
    %45 = arith.addi %2, %44 : vector<8x512xi32>
    %c0_i32_20 = arith.constant 0 : i32
    %46 = vector.broadcast %c0_i32_20 : i32 to vector<8x512xi32>
    %47 = arith.cmpi sge, %43, %46 : vector<8x512xi32>
    %c16_i32_21 = arith.constant 16 : i32
    %48 = vector.broadcast %c16_i32_21 : i32 to vector<8x512xi32>
    %49 = arith.cmpi slt, %43, %48 : vector<8x512xi32>
    %50 = arith.andi %47, %49 : vector<8x512xi1>
    %c0_i32_22 = arith.constant 0 : i32
    %51 = vector.broadcast %c0_i32_22 : i32 to vector<8x512xi32>
    %52 = arith.cmpi sge, %45, %51 : vector<8x512xi32>
    %53 = arith.andi %50, %52 : vector<8x512xi1>
    %c16_i32_23 = arith.constant 16 : i32
    %54 = vector.broadcast %c16_i32_23 : i32 to vector<8x512xi32>
    %55 = arith.cmpi slt, %45, %54 : vector<8x512xi32>
    %56 = arith.andi %53, %55 : vector<8x512xi1>
    %cst_24 = arith.constant 0.000000e+00 : f32
    %57 = vector.broadcast %cst_24 : f32 to vector<8x512xf32>
    %58 = arith.select %56, %41, %57 : vector<8x512xi1>, vector<8x512xf32>
    %c16 = arith.constant 16 : index
    %c0_25 = arith.constant 0 : index
    %59 = vector.load %arg5[%c16, %c0_25] : memref<72x512xf32, #tpu.memory_space<vmem>>, vector<8x512xf32>
    tpu.vector_store %arg5[%c16, %c0_25], %58 {strides = array<i32>} : memref<72x512xf32, #tpu.memory_space<vmem>>, vector<8x512xf32>,
    %c1_i32_26 = arith.constant 1 : i32
    %60 = tpu.dynamic_rotate %0 by %c1_i32_26 dim 1 : vector<8x512xf32>, i32 -> vector<8x512xf32>
    %c0_i32_27 = arith.constant 0 : i32
    %61 = vector.broadcast %c0_i32_27 : i32 to vector<8x512xi32>
    %62 = arith.addi %1, %61 : vector<8x512xi32>
    %c-1_i32_28 = arith.constant -1 : i32
    %63 = vector.broadcast %c-1_i32_28 : i32 to vector<8x512xi32>
    %64 = arith.addi %2, %63 : vector<8x512xi32>
    %c0_i32_29 = arith.constant 0 : i32
    %65 = vector.broadcast %c0_i32_29 : i32 to vector<8x512xi32>
    %66 = arith.cmpi sge, %62, %65 : vector<8x512xi32>
    %c16_i32_30 = arith.constant 16 : i32
    %67 = vector.broadcast %c16_i32_30 : i32 to vector<8x512xi32>
    %68 = arith.cmpi slt, %62, %67 : vector<8x512xi32>
    %69 = arith.andi %66, %68 : vector<8x512xi1>
    %c0_i32_31 = arith.constant 0 : i32
    %70 = vector.broadcast %c0_i32_31 : i32 to vector<8x512xi32>
    %71 = arith.cmpi sge, %64, %70 : vector<8x512xi32>
    %72 = arith.andi %69, %71 : vector<8x512xi1>
    %c16_i32_32 = arith.constant 16 : i32
    %73 = vector.broadcast %c16_i32_32 : i32 to vector<8x512xi32>
    %74 = arith.cmpi slt, %64, %73 : vector<8x512xi32>
    %75 = arith.andi %72, %74 : vector<8x512xi1>
    %cst_33 = arith.constant 0.000000e+00 : f32
    %76 = vector.broadcast %cst_33 : f32 to vector<8x512xf32>
    %77 = arith.select %75, %60, %76 : vector<8x512xi1>, vector<8x512xf32>
    %c24 = arith.constant 24 : index
    %c0_34 = arith.constant 0 : index
    %78 = vector.load %arg5[%c24, %c0_34] : memref<72x512xf32, #tpu.memory_space<vmem>>, vector<8x512xf32>
    tpu.vector_store %arg5[%c24, %c0_34], %77 {strides = array<i32>} : memref<72x512xf32, #tpu.memory_space<vmem>>, vector<8x512xf32>,
    %c0_i32_35 = arith.constant 0 : i32
    %79 = vector.broadcast %c0_i32_35 : i32 to vector<8x512xi32>
    %80 = arith.addi %1, %79 : vector<8x512xi32>
    %c0_i32_36 = arith.constant 0 : i32
    %81 = vector.broadcast %c0_i32_36 : i32 to vector<8x512xi32>
    %82 = arith.addi %2, %81 : vector<8x512xi32>
    %c0_i32_37 = arith.constant 0 : i32
    %83 = vector.broadcast %c0_i32_37 : i32 to vector<8x512xi32>
    %84 = arith.cmpi sge, %80, %83 : vector<8x512xi32>
    %c16_i32_38 = arith.constant 16 : i32
    %85 = vector.broadcast %c16_i32_38 : i32 to vector<8x512xi32>
    %86 = arith.cmpi slt, %80, %85 : vector<8x512xi32>
    %87 = arith.andi %84, %86 : vector<8x512xi1>
    %c0_i32_39 = arith.constant 0 : i32
    %88 = vector.broadcast %c0_i32_39 : i32 to vector<8x512xi32>
    %89 = arith.cmpi sge, %82, %88 : vector<8x512xi32>
    %90 = arith.andi %87, %89 : vector<8x512xi1>
    %c16_i32_40 = arith.constant 16 : i32
    %91 = vector.broadcast %c16_i32_40 : i32 to vector<8x512xi32>
    %92 = arith.cmpi slt, %82, %91 : vector<8x512xi32>
    %93 = arith.andi %90, %92 : vector<8x512xi1>
    %cst_41 = arith.constant 0.000000e+00 : f32
    %94 = vector.broadcast %cst_41 : f32 to vector<8x512xf32>
    %95 = arith.select %93, %0, %94 : vector<8x512xi1>, vector<8x512xf32>
    %c32 = arith.constant 32 : index
    %c0_42 = arith.constant 0 : index
    %96 = vector.load %arg5[%c32, %c0_42] : memref<72x512xf32, #tpu.memory_space<vmem>>, vector<8x512xf32>
    tpu.vector_store %arg5[%c32, %c0_42], %95 {strides = array<i32>} : memref<72x512xf32, #tpu.memory_space<vmem>>, vector<8x512xf32>,
    %c511_i32 = arith.constant 511 : i32
    %97 = tpu.dynamic_rotate %0 by %c511_i32 dim 1 : vector<8x512xf32>, i32 -> vector<8x512xf32>
    %c0_i32_43 = arith.constant 0 : i32
    %98 = vector.broadcast %c0_i32_43 : i32 to vector<8x512xi32>
    %99 = arith.addi %1, %98 : vector<8x512xi32>
    %c1_i32_44 = arith.constant 1 : i32
    %100 = vector.broadcast %c1_i32_44 : i32 to vector<8x512xi32>
    %101 = arith.addi %2, %100 : vector<8x512xi32>
    %c0_i32_45 = arith.constant 0 : i32
    %102 = vector.broadcast %c0_i32_45 : i32 to vector<8x512xi32>
    %103 = arith.cmpi sge, %99, %102 : vector<8x512xi32>
    %c16_i32_46 = arith.constant 16 : i32
    %104 = vector.broadcast %c16_i32_46 : i32 to vector<8x512xi32>
    %105 = arith.cmpi slt, %99, %104 : vector<8x512xi32>
    %106 = arith.andi %103, %105 : vector<8x512xi1>
    %c0_i32_47 = arith.constant 0 : i32
    %107 = vector.broadcast %c0_i32_47 : i32 to vector<8x512xi32>
    %108 = arith.cmpi sge, %101, %107 : vector<8x512xi32>
    %109 = arith.andi %106, %108 : vector<8x512xi1>
    %c16_i32_48 = arith.constant 16 : i32
    %110 = vector.broadcast %c16_i32_48 : i32 to vector<8x512xi32>
    %111 = arith.cmpi slt, %101, %110 : vector<8x512xi32>
    %112 = arith.andi %109, %111 : vector<8x512xi1>
    %cst_49 = arith.constant 0.000000e+00 : f32
    %113 = vector.broadcast %cst_49 : f32 to vector<8x512xf32>
    %114 = arith.select %112, %97, %113 : vector<8x512xi1>, vector<8x512xf32>
    %c40 = arith.constant 40 : index
    %c0_50 = arith.constant 0 : index
    %115 = vector.load %arg5[%c40, %c0_50] : memref<72x512xf32, #tpu.memory_space<vmem>>, vector<8x512xf32>
    tpu.vector_store %arg5[%c40, %c0_50], %114 {strides = array<i32>} : memref<72x512xf32, #tpu.memory_space<vmem>>, vector<8x512xf32>,
    %c497_i32 = arith.constant 497 : i32
    %116 = tpu.dynamic_rotate %0 by %c497_i32 dim 1 : vector<8x512xf32>, i32 -> vector<8x512xf32>
    %c1_i32_51 = arith.constant 1 : i32
    %117 = vector.broadcast %c1_i32_51 : i32 to vector<8x512xi32>
    %118 = arith.addi %1, %117 : vector<8x512xi32>
    %c-1_i32_52 = arith.constant -1 : i32
    %119 = vector.broadcast %c-1_i32_52 : i32 to vector<8x512xi32>
    %120 = arith.addi %2, %119 : vector<8x512xi32>
    %c0_i32_53 = arith.constant 0 : i32
    %121 = vector.broadcast %c0_i32_53 : i32 to vector<8x512xi32>
    %122 = arith.cmpi sge, %118, %121 : vector<8x512xi32>
    %c16_i32_54 = arith.constant 16 : i32
    %123 = vector.broadcast %c16_i32_54 : i32 to vector<8x512xi32>
    %124 = arith.cmpi slt, %118, %123 : vector<8x512xi32>
    %125 = arith.andi %122, %124 : vector<8x512xi1>
    %c0_i32_55 = arith.constant 0 : i32
    %126 = vector.broadcast %c0_i32_55 : i32 to vector<8x512xi32>
    %127 = arith.cmpi sge, %120, %126 : vector<8x512xi32>
    %128 = arith.andi %125, %127 : vector<8x512xi1>
    %c16_i32_56 = arith.constant 16 : i32
    %129 = vector.broadcast %c16_i32_56 : i32 to vector<8x512xi32>
    %130 = arith.cmpi slt, %120, %129 : vector<8x512xi32>
    %131 = arith.andi %128, %130 : vector<8x512xi1>
    %cst_57 = arith.constant 0.000000e+00 : f32
    %132 = vector.broadcast %cst_57 : f32 to vector<8x512xf32>
    %133 = arith.select %131, %116, %132 : vector<8x512xi1>, vector<8x512xf32>
    %c48 = arith.constant 48 : index
    %c0_58 = arith.constant 0 : index
    %134 = vector.load %arg5[%c48, %c0_58] : memref<72x512xf32, #tpu.memory_space<vmem>>, vector<8x512xf32>
    tpu.vector_store %arg5[%c48, %c0_58], %133 {strides = array<i32>} : memref<72x512xf32, #tpu.memory_space<vmem>>, vector<8x512xf32>,
    %c496_i32 = arith.constant 496 : i32
    %135 = tpu.dynamic_rotate %0 by %c496_i32 dim 1 : vector<8x512xf32>, i32 -> vector<8x512xf32>
    %c1_i32_59 = arith.constant 1 : i32
    %136 = vector.broadcast %c1_i32_59 : i32 to vector<8x512xi32>
    %137 = arith.addi %1, %136 : vector<8x512xi32>
    %c0_i32_60 = arith.constant 0 : i32
    %138 = vector.broadcast %c0_i32_60 : i32 to vector<8x512xi32>
    %139 = arith.addi %2, %138 : vector<8x512xi32>
    %c0_i32_61 = arith.constant 0 : i32
    %140 = vector.broadcast %c0_i32_61 : i32 to vector<8x512xi32>
    %141 = arith.cmpi sge, %137, %140 : vector<8x512xi32>
    %c16_i32_62 = arith.constant 16 : i32
    %142 = vector.broadcast %c16_i32_62 : i32 to vector<8x512xi32>
    %143 = arith.cmpi slt, %137, %142 : vector<8x512xi32>
    %144 = arith.andi %141, %143 : vector<8x512xi1>
    %c0_i32_63 = arith.constant 0 : i32
    %145 = vector.broadcast %c0_i32_63 : i32 to vector<8x512xi32>
    %146 = arith.cmpi sge, %139, %145 : vector<8x512xi32>
    %147 = arith.andi %144, %146 : vector<8x512xi1>
    %c16_i32_64 = arith.constant 16 : i32
    %148 = vector.broadcast %c16_i32_64 : i32 to vector<8x512xi32>
    %149 = arith.cmpi slt, %139, %148 : vector<8x512xi32>
    %150 = arith.andi %147, %149 : vector<8x512xi1>
    %cst_65 = arith.constant 0.000000e+00 : f32
    %151 = vector.broadcast %cst_65 : f32 to vector<8x512xf32>
    %152 = arith.select %150, %135, %151 : vector<8x512xi1>, vector<8x512xf32>
    %c56 = arith.constant 56 : index
    %c0_66 = arith.constant 0 : index
    %153 = vector.load %arg5[%c56, %c0_66] : memref<72x512xf32, #tpu.memory_space<vmem>>, vector<8x512xf32>
    tpu.vector_store %arg5[%c56, %c0_66], %152 {strides = array<i32>} : memref<72x512xf32, #tpu.memory_space<vmem>>, vector<8x512xf32>,
    %c495_i32 = arith.constant 495 : i32
    %154 = tpu.dynamic_rotate %0 by %c495_i32 dim 1 : vector<8x512xf32>, i32 -> vector<8x512xf32>
    %c1_i32_67 = arith.constant 1 : i32
    %155 = vector.broadcast %c1_i32_67 : i32 to vector<8x512xi32>
    %156 = arith.addi %1, %155 : vector<8x512xi32>
    %c1_i32_68 = arith.constant 1 : i32
    %157 = vector.broadcast %c1_i32_68 : i32 to vector<8x512xi32>
    %158 = arith.addi %2, %157 : vector<8x512xi32>
    %c0_i32_69 = arith.constant 0 : i32
    %159 = vector.broadcast %c0_i32_69 : i32 to vector<8x512xi32>
    %160 = arith.cmpi sge, %156, %159 : vector<8x512xi32>
    %c16_i32_70 = arith.constant 16 : i32
    %161 = vector.broadcast %c16_i32_70 : i32 to vector<8x512xi32>
    %162 = arith.cmpi slt, %156, %161 : vector<8x512xi32>
    %163 = arith.andi %160, %162 : vector<8x512xi1>
    %c0_i32_71 = arith.constant 0 : i32
    %164 = vector.broadcast %c0_i32_71 : i32 to vector<8x512xi32>
    %165 = arith.cmpi sge, %158, %164 : vector<8x512xi32>
    %166 = arith.andi %163, %165 : vector<8x512xi1>
    %c16_i32_72 = arith.constant 16 : i32
    %167 = vector.broadcast %c16_i32_72 : i32 to vector<8x512xi32>
    %168 = arith.cmpi slt, %158, %167 : vector<8x512xi32>
    %169 = arith.andi %166, %168 : vector<8x512xi1>
    %cst_73 = arith.constant 0.000000e+00 : f32
    %170 = vector.broadcast %cst_73 : f32 to vector<8x512xf32>
    %171 = arith.select %169, %154, %170 : vector<8x512xi1>, vector<8x512xf32>
    %c64 = arith.constant 64 : index
    %c0_74 = arith.constant 0 : index
    %172 = vector.load %arg5[%c64, %c0_74] : memref<72x512xf32, #tpu.memory_space<vmem>>, vector<8x512xf32>
    tpu.vector_store %arg5[%c64, %c0_74], %171 {strides = array<i32>} : memref<72x512xf32, #tpu.memory_space<vmem>>, vector<8x512xf32>,
    %c0_75 = arith.constant 0 : index
    %c0_76 = arith.constant 0 : index
    %173 = vector.load %arg3[%c0_75, %c0_76] : memref<16x72xbf16, #tpu.memory_space<vmem>>, vector<16x72xbf16>
    %c0_77 = arith.constant 0 : index
    %c0_78 = arith.constant 0 : index
    %174 = vector.load %arg5[%c0_77, %c0_78] : memref<72x512xf32, #tpu.memory_space<vmem>>, vector<72x512xf32>
    %175 = arith.truncf %174 : vector<72x512xf32> to vector<72x512xbf16>
    %cst_79 = arith.constant dense<0.000000e+00> : vector<16x512xf32>
    %176 = tpu.matmul %173, %175, %cst_79 {dimension_numbers = #tpu.dot_dimension_numbers<[1], [0], [0], [1], [0, 0, 1, 1], [], []>} : vector<16x72xbf16>, vector<72x512xbf16>, vector<16x512xf32> -> vector<16x512xf32>
    %c0_80 = arith.constant 0 : index
    %c0_81 = arith.constant 0 : index
    %177 = vector.load %arg4[%c0_80, %c0_81] : memref<16x512xf32, #tpu.memory_space<vmem>>, vector<16x512xf32>
    tpu.vector_store %arg4[%c0_80, %c0_81], %176 {strides = array<i32>} : memref<16x512xf32, #tpu.memory_space<vmem>>, vector<16x512xf32>,
    return
  }
  func.func @transform_0(%arg0: i32) -> (i32, i32) {
    %c0_i32 = arith.constant 0 : i32
    %c0_i32_0 = arith.constant 0 : i32
    %c0_i32_1 = arith.constant 0 : i32
    return %c0_i32, %c0_i32_0 : i32, i32
  }
  func.func @transform_1(%arg0: i32) -> (i32, i32) {
    %c0_i32 = arith.constant 0 : i32
    %c0_i32_0 = arith.constant 0 : i32
    %c0_i32_1 = arith.constant 0 : i32
    return %c0_i32, %c0_i32_0 : i32, i32
  }
  func.func @transform_2(%arg0: i32) -> (i32, i32) {
    %c0_i32 = arith.constant 0 : i32
    %c0_i32_0 = arith.constant 0 : i32
    %c0_i32_1 = arith.constant 0 : i32
    return %c0_i32, %c0_i32_0 : i32, i32
  }
  func.func @transform_3(%arg0: i32) -> (i32, i32) {
    %c0_i32 = arith.constant 0 : i32
    %c0_i32_0 = arith.constant 0 : i32
    %c0_i32_1 = arith.constant 0 : i32
    return %c0_i32, %c0_i32_0 : i32, i32
  }
}

</mosaic_0001>

<llo_original>
// kernel: basenet_conv1.1
$region0: #{basenet_conv1.1}
  #allocation0 [shape = 'u32[]', space=smem, size = 0x4, offset = 0x4, fixed_abs, tag = 'smem constant byte address 0x4 - core index']
  #allocation1 [shape = 'u32[72,128]{1,0:T(1,128)}', space=vmem, size = 0x9000, scoped, tag = 'internal scratch']
  #allocation2 [shape = 'f32[72,512]{1,0:T(8,128)}', space=vmem, size = 0x24000, scoped, tag = 'scratch operand']
  %s0 = inlined_call_operand.vmem [shape: s32[16,512], index: 0, kind: input, shape index: {}]
  %s1 = inlined_call_operand.vmem [shape: f32[8,512], index: 1, kind: input, shape index: {}]
  %s2 = inlined_call_operand.vmem [shape: bf16[16,72], index: 2, kind: input, shape index: {}]
  %s3 = inlined_call_operand.vmem [shape: f32[16,512], index: 3, kind: output, shape index: {}]
  %s4 = sld [smem:[#allocation0]]
  $region22: #{basenet_conv1.1} parent=0
    _
  %s6 = ssub.s32 1, %s4
  %s7 = scalar_select 0, %s6, %s4
  // Predicated region
  $region2: #{basenet_conv1.1} parent=0 // pred_check
    _
  $region3: #{basenet_conv1.1} parent=0 // pred_check_branch
    %9 = sbr.rel (0) target = $region5
  $region4: #{basenet_conv1.1} parent=0 // pred_region
    _
  $region5: #{basenet_conv1.1} parent=0 // pred_fallthru
    _
  // Predicated region
  $region6: #{basenet_conv1.1} parent=0 // pred_check
    _
  $region7: #{basenet_conv1.1} parent=0 // pred_check_branch
    %11 = sbr.rel (0) target = $region9
  $region8: #{basenet_conv1.1} parent=0 // pred_region
    _
  $region9: #{basenet_conv1.1} parent=0 // pred_fallthru
    _
  // Predicated region
  $region10: #{basenet_conv1.1} parent=0 // pred_check
    _
  $region11: #{basenet_conv1.1} parent=0 // pred_check_branch
    %13 = sbr.rel (0) target = $region13
  $region12: #{basenet_conv1.1} parent=0 // pred_region
    _
  $region13: #{basenet_conv1.1} parent=0 // pred_fallthru
    _
  %v15 = vld [vmem:[%s1] sm:$0xff]
  %v16 = vld [vmem:[%s1 + $0x8] sm:$0xff]
  %v17 = vld [vmem:[%s1 + $0x10] sm:$0xff]
  %v18 = vld [vmem:[%s1 + $0x18] sm:$0xff]
  %v19 = vld [vmem:[%s0] sm:$0xff]
  %v20 = vld [vmem:[%s0 + $0x8] sm:$0xff]
  %v21 = vld [vmem:[%s0 + $0x10] sm:$0xff]
  %v22 = vld [vmem:[%s0 + $0x18] sm:$0xff]
  %v23 = vld [vmem:[%s0 + $0x20] sm:$0xff]
  %v24 = vld [vmem:[%s0 + $0x28] sm:$0xff]
  %v25 = vld [vmem:[%s0 + $0x30] sm:$0xff]
  %v26 = vld [vmem:[%s0 + $0x38] sm:$0xff]
  %27 = vrot.lane.b32.xlu0 %v15, 17
  %v28 = vpop.permute.xlu0 %27
  %29 = vrot.lane.b32.xlu0 %v16, 17
  %v30 = vpop.permute.xlu0 %29
  %31 = vrot.lane.b32.xlu0 %v17, 17
  %v32 = vpop.permute.xlu0 %31
  %33 = vrot.lane.b32.xlu0 %v18, 17
  %v34 = vpop.permute.xlu0 %33
  %v35 = vlaneseq
  %v36 = vand.u32 %v35, 127
  %vm37 = vcmp.lt.s32.totalorder %v36, 17
  %v38 = vsel %vm37, %v32, %v34
  %v39 = vsel %vm37, %v30, %v32
  %v40 = vsel %vm37, %v28, %v30
  %v41 = vsel %vm37, %v34, %v28
  %v42 = vadd.s32 %v19, 4294967295
  %v43 = vadd.s32 %v20, 4294967295
  %v44 = vadd.s32 %v21, 4294967295
  %v45 = vadd.s32 %v22, 4294967295
  %v46 = vadd.s32 %v23, 4294967295
  %v47 = vadd.s32 %v24, 4294967295
  %v48 = vadd.s32 %v25, 4294967295
  %v49 = vadd.s32 %v26, 4294967295
  %vm50 = vcmp.ge.s32.totalorder %v42, 0
  %vm51 = vcmp.ge.s32.totalorder %v43, 0
  %vm52 = vcmp.ge.s32.totalorder %v44, 0
  %vm53 = vcmp.ge.s32.totalorder %v45, 0
  %vm54 = vcmp.lt.s32.totalorder %v42, 16
  %vm55 = vcmp.lt.s32.totalorder %v43, 16
  %vm56 = vcmp.lt.s32.totalorder %v44, 16
  %vm57 = vcmp.lt.s32.totalorder %v45, 16
  %vm58 = vmand %vm50, %vm54
  %vm59 = vmand %vm51, %vm55
  %vm60 = vmand %vm52, %vm56
  %vm61 = vmand %vm53, %vm57
  %vm62 = vcmp.ge.s32.totalorder %v46, 0
  %vm63 = vcmp.ge.s32.totalorder %v47, 0
  %vm64 = vcmp.ge.s32.totalorder %v48, 0
  %vm65 = vcmp.ge.s32.totalorder %v49, 0
  %vm66 = vmand %vm58, %vm62
  %vm67 = vmand %vm59, %vm63
  %vm68 = vmand %vm60, %vm64
  %vm69 = vmand %vm61, %vm65
  %vm70 = vcmp.lt.s32.totalorder %v46, 16
  %vm71 = vcmp.lt.s32.totalorder %v47, 16
  %vm72 = vcmp.lt.s32.totalorder %v48, 16
  %vm73 = vcmp.lt.s32.totalorder %v49, 16
  %vm74 = vmand %vm66, %vm70
  %vm75 = vmand %vm67, %vm71
  %vm76 = vmand %vm68, %vm72
  %vm77 = vmand %vm69, %vm73
  %v78 = vsel %vm74, %v41, 0.0
  %v79 = vsel %vm75, %v40, 0.0
  %v80 = vsel %vm76, %v39, 0.0
  %v81 = vsel %vm77, %v38, 0.0
  %82 = vst [vmem:[#allocation2] sm:$0xff] %v78
  %83 = vst [vmem:[#allocation2 + $0x8] sm:$0xff] %v79
  %84 = vst [vmem:[#allocation2 + $0x10] sm:$0xff] %v80
  %85 = vst [vmem:[#allocation2 + $0x18] sm:$0xff] %v81
  %86 = vrot.lane.b32.xlu0 %v15, 16
  %v87 = vpop.permute.xlu0 %86
  %88 = vrot.lane.b32.xlu0 %v16, 16
  %v89 = vpop.permute.xlu0 %88
  %90 = vrot.lane.b32.xlu0 %v17, 16
  %v91 = vpop.permute.xlu0 %90
  %92 = vrot.lane.b32.xlu0 %v18, 16
  %v93 = vpop.permute.xlu0 %92
  %vm94 = vcmp.lt.s32.totalorder %v36, 16
  %v95 = vsel %vm94, %v91, %v93
  %v96 = vsel %vm94, %v89, %v91
  %v97 = vsel %vm94, %v87, %v89
  %v98 = vsel %vm94, %v93, %v87
  %vm99 = vcmp.ge.s32.totalorder %v23, 0
  %vm100 = vcmp.ge.s32.totalorder %v24, 0
  %vm101 = vcmp.ge.s32.totalorder %v25, 0
  %vm102 = vcmp.ge.s32.totalorder %v26, 0
  %vm103 = vmand %vm58, %vm99
  %vm104 = vmand %vm59, %vm100
  %vm105 = vmand %vm60, %vm101
  %vm106 = vmand %vm61, %vm102
  %vm107 = vcmp.lt.s32.totalorder %v23, 16
  %vm108 = vcmp.lt.s32.totalorder %v24, 16
  %vm109 = vcmp.lt.s32.totalorder %v25, 16
  %vm110 = vcmp.lt.s32.totalorder %v26, 16
  %vm111 = vmand %vm103, %vm107
  %vm112 = vmand %vm104, %vm108
  %vm113 = vmand %vm105, %vm109
  %vm114 = vmand %vm106, %vm110
  %v115 = vsel %vm111, %v98, 0.0
  %v116 = vsel %vm112, %v97, 0.0
  %v117 = vsel %vm113, %v96, 0.0
  %v118 = vsel %vm114, %v95, 0.0
  %119 = vst [vmem:[#allocation2 + $0x20] sm:$0xff] %v115
  %120 = vst [vmem:[#allocation2 + $0x28] sm:$0xff] %v116
  %121 = vst [vmem:[#allocation2 + $0x30] sm:$0xff] %v117
  %122 = vst [vmem:[#allocation2 + $0x38] sm:$0xff] %v118
  %123 = vrot.lane.b32.xlu0 %v15, 15
  %v124 = vpop.permute.xlu0 %123
  %125 = vrot.lane.b32.xlu0 %v16, 15
  %v126 = vpop.permute.xlu0 %125
  %127 = vrot.lane.b32.xlu0 %v17, 15
  %v128 = vpop.permute.xlu0 %127
  %129 = vrot.lane.b32.xlu0 %v18, 15
  %v130 = vpop.permute.xlu0 %129
  %vm131 = vcmp.lt.s32.totalorder %v36, 15
  %v132 = vsel %vm131, %v128, %v130
  %v133 = vsel %vm131, %v126, %v128
  %v134 = vsel %vm131, %v124, %v126
  %v135 = vsel %vm131, %v130, %v124
  %v136 = vadd.s32 %v23, 1
  %v137 = vadd.s32 %v24, 1
  %v138 = vadd.s32 %v25, 1
  %v139 = vadd.s32 %v26, 1
  %vm140 = vcmp.ge.s32.totalorder %v136, 0
  %vm141 = vcmp.ge.s32.totalorder %v137, 0
  %vm142 = vcmp.ge.s32.totalorder %v138, 0
  %vm143 = vcmp.ge.s32.totalorder %v139, 0
  %vm144 = vmand %vm58, %vm140
  %vm145 = vmand %vm59, %vm141
  %vm146 = vmand %vm60, %vm142
  %vm147 = vmand %vm61, %vm143
  %vm148 = vcmp.lt.s32.totalorder %v136, 16
  %vm149 = vcmp.lt.s32.totalorder %v137, 16
  %vm150 = vcmp.lt.s32.totalorder %v138, 16
  %vm151 = vcmp.lt.s32.totalorder %v139, 16
  %vm152 = vmand %vm144, %vm148
  %vm153 = vmand %vm145, %vm149
  %vm154 = vmand %vm146, %vm150
  %vm155 = vmand %vm147, %vm151
  %v156 = vsel %vm152, %v135, 0.0
  %v157 = vsel %vm153, %v134, 0.0
  %v158 = vsel %vm154, %v133, 0.0
  %v159 = vsel %vm155, %v132, 0.0
  %160 = vst [vmem:[#allocation2 + $0x40] sm:$0xff] %v156
  %161 = vst [vmem:[#allocation2 + $0x48] sm:$0xff] %v157
  %162 = vst [vmem:[#allocation2 + $0x50] sm:$0xff] %v158
  %163 = vst [vmem:[#allocation2 + $0x58] sm:$0xff] %v159
  %164 = vrot.lane.b32.xlu0 %v15, 1
  %v165 = vpop.permute.xlu0 %164
  %166 = vrot.lane.b32.xlu0 %v16, 1
  %v167 = vpop.permute.xlu0 %166
  %168 = vrot.lane.b32.xlu0 %v17, 1
  %v169 = vpop.permute.xlu0 %168
  %170 = vrot.lane.b32.xlu0 %v18, 1
  %v171 = vpop.permute.xlu0 %170
  %vm172 = vcmp.lt.s32.totalorder %v36, 1
  %v173 = vsel %vm172, %v169, %v171
  %v174 = vsel %vm172, %v167, %v169
  %v175 = vsel %vm172, %v165, %v167
  %v176 = vsel %vm172, %v171, %v165
  %vm177 = vcmp.ge.s32.totalorder %v19, 0
  %vm178 = vcmp.ge.s32.totalorder %v20, 0
  %vm179 = vcmp.ge.s32.totalorder %v21, 0
  %vm180 = vcmp.ge.s32.totalorder %v22, 0
  %vm181 = vcmp.lt.s32.totalorder %v19, 16
  %vm182 = vcmp.lt.s32.totalorder %v20, 16
  %vm183 = vcmp.lt.s32.totalorder %v21, 16
  %vm184 = vcmp.lt.s32.totalorder %v22, 16
  %vm185 = vmand %vm177, %vm181
  %vm186 = vmand %vm178, %vm182
  %vm187 = vmand %vm179, %vm183
  %vm188 = vmand %vm180, %vm184
  %vm189 = vmand %vm185, %vm62
  %vm190 = vmand %vm186, %vm63
  %vm191 = vmand %vm187, %vm64
  %vm192 = vmand %vm188, %vm65
  %vm193 = vmand %vm189, %vm70
  %vm194 = vmand %vm190, %vm71
  %vm195 = vmand %vm191, %vm72
  %vm196 = vmand %vm192, %vm73
  %v197 = vsel %vm193, %v176, 0.0
  %v198 = vsel %vm194, %v175, 0.0
  %v199 = vsel %vm195, %v174, 0.0
  %v200 = vsel %vm196, %v173, 0.0
  %201 = vst [vmem:[#allocation2 + $0x60] sm:$0xff] %v197
  %202 = vst [vmem:[#allocation2 + $0x68] sm:$0xff] %v198
  %203 = vst [vmem:[#allocation2 + $0x70] sm:$0xff] %v199
  %204 = vst [vmem:[#allocation2 + $0x78] sm:$0xff] %v200
  %vm205 = vmand %vm185, %vm99
  %vm206 = vmand %vm186, %vm100
  %vm207 = vmand %vm187, %vm101
  %vm208 = vmand %vm188, %vm102
  %vm209 = vmand %vm205, %vm107
  %vm210 = vmand %vm206, %vm108
  %vm211 = vmand %vm207, %vm109
  %vm212 = vmand %vm208, %vm110
  %v213 = vsel %vm209, %v15, 0.0
  %v214 = vsel %vm210, %v16, 0.0
  %v215 = vsel %vm211, %v17, 0.0
  %v216 = vsel %vm212, %v18, 0.0
  %217 = vst [vmem:[#allocation2 + $0x80] sm:$0xff] %v213
  %218 = vst [vmem:[#allocation2 + $0x88] sm:$0xff] %v214
  %219 = vst [vmem:[#allocation2 + $0x90] sm:$0xff] %v215
  %220 = vst [vmem:[#allocation2 + $0x98] sm:$0xff] %v216
  %221 = vrot.lane.b32.xlu0 %v15, 127
  %v222 = vpop.permute.xlu0 %221
  %223 = vrot.lane.b32.xlu0 %v16, 127
  %v224 = vpop.permute.xlu0 %223
  %225 = vrot.lane.b32.xlu0 %v17, 127
  %v226 = vpop.permute.xlu0 %225
  %227 = vrot.lane.b32.xlu0 %v18, 127
  %v228 = vpop.permute.xlu0 %227
  %vm229 = vcmp.lt.s32.totalorder %v36, 127
  %v230 = vsel %vm229, %v226, %v228
  %v231 = vsel %vm229, %v224, %v226
  %v232 = vsel %vm229, %v222, %v224
  %v233 = vsel %vm229, %v228, %v222
  %vm234 = vmand %vm185, %vm140
  %vm235 = vmand %vm186, %vm141
  %vm236 = vmand %vm187, %vm142
  %vm237 = vmand %vm188, %vm143
  %vm238 = vmand %vm234, %vm148
  %vm239 = vmand %vm235, %vm149
  %vm240 = vmand %vm236, %vm150
  %vm241 = vmand %vm237, %vm151
  %v242 = vsel %vm238, %v232, 0.0
  %v243 = vsel %vm239, %v231, 0.0
  %v244 = vsel %vm240, %v230, 0.0
  %v245 = vsel %vm241, %v233, 0.0
  %246 = vst [vmem:[#allocation2 + $0xa0] sm:$0xff] %v242
  %247 = vst [vmem:[#allocation2 + $0xa8] sm:$0xff] %v243
  %248 = vst [vmem:[#allocation2 + $0xb0] sm:$0xff] %v244
  %249 = vst [vmem:[#allocation2 + $0xb8] sm:$0xff] %v245
  %250 = vrot.lane.b32.xlu0 %v15, 113
  %v251 = vpop.permute.xlu0 %250
  %252 = vrot.lane.b32.xlu0 %v16, 113
  %v253 = vpop.permute.xlu0 %252
  %254 = vrot.lane.b32.xlu0 %v17, 113
  %v255 = vpop.permute.xlu0 %254
  %256 = vrot.lane.b32.xlu0 %v18, 113
  %v257 = vpop.permute.xlu0 %256
  %vm258 = vcmp.lt.s32.totalorder %v36, 113
  %v259 = vsel %vm258, %v255, %v257
  %v260 = vsel %vm258, %v253, %v255
  %v261 = vsel %vm258, %v251, %v253
  %v262 = vsel %vm258, %v257, %v251
  %v263 = vadd.s32 %v19, 1
  %v264 = vadd.s32 %v20, 1
  %v265 = vadd.s32 %v21, 1
  %v266 = vadd.s32 %v22, 1
  %vm267 = vcmp.ge.s32.totalorder %v263, 0
  %vm268 = vcmp.ge.s32.totalorder %v264, 0
  %vm269 = vcmp.ge.s32.totalorder %v265, 0
  %vm270 = vcmp.ge.s32.totalorder %v266, 0
  %vm271 = vcmp.lt.s32.totalorder %v263, 16
  %vm272 = vcmp.lt.s32.totalorder %v264, 16
  %vm273 = vcmp.lt.s32.totalorder %v265, 16
  %vm274 = vcmp.lt.s32.totalorder %v266, 16
  %vm275 = vmand %vm267, %vm271
  %vm276 = vmand %vm268, %vm272
  %vm277 = vmand %vm269, %vm273
  %vm278 = vmand %vm270, %vm274
  %vm279 = vmand %vm275, %vm62
  %vm280 = vmand %vm276, %vm63
  %vm281 = vmand %vm277, %vm64
  %vm282 = vmand %vm278, %vm65
  %vm283 = vmand %vm279, %vm70
  %vm284 = vmand %vm280, %vm71
  %vm285 = vmand %vm281, %vm72
  %vm286 = vmand %vm282, %vm73
  %v287 = vsel %vm283, %v261, 0.0
  %v288 = vsel %vm284, %v260, 0.0
  %v289 = vsel %vm285, %v259, 0.0
  %v290 = vsel %vm286, %v262, 0.0
  %291 = vst [vmem:[#allocation2 + $0xc0] sm:$0xff] %v287
  %292 = vst [vmem:[#allocation2 + $0xc8] sm:$0xff] %v288
  %293 = vst [vmem:[#allocation2 + $0xd0] sm:$0xff] %v289
  %294 = vst [vmem:[#allocation2 + $0xd8] sm:$0xff] %v290
  %295 = vrot.lane.b32.xlu0 %v15, 112
  %v296 = vpop.permute.xlu0 %295
  %297 = vrot.lane.b32.xlu0 %v16, 112
  %v298 = vpop.permute.xlu0 %297
  %299 = vrot.lane.b32.xlu0 %v17, 112
  %v300 = vpop.permute.xlu0 %299
  %301 = vrot.lane.b32.xlu0 %v18, 112
  %v302 = vpop.permute.xlu0 %301
  %vm303 = vcmp.lt.s32.totalorder %v36, 112
  %v304 = vsel %vm303, %v300, %v302
  %v305 = vsel %vm303, %v298, %v300
  %v306 = vsel %vm303, %v296, %v298
  %v307 = vsel %vm303, %v302, %v296
  %vm308 = vmand %vm275, %vm99
  %vm309 = vmand %vm276, %vm100
  %vm310 = vmand %vm277, %vm101
  %vm311 = vmand %vm278, %vm102
  %vm312 = vmand %vm308, %vm107
  %vm313 = vmand %vm309, %vm108
  %vm314 = vmand %vm310, %vm109
  %vm315 = vmand %vm311, %vm110
  %v316 = vsel %vm312, %v306, 0.0
  %v317 = vsel %vm313, %v305, 0.0
  %v318 = vsel %vm314, %v304, 0.0
  %v319 = vsel %vm315, %v307, 0.0
  %320 = vst [vmem:[#allocation2 + $0xe0] sm:$0xff] %v316
  %321 = vst [vmem:[#allocation2 + $0xe8] sm:$0xff] %v317
  %322 = vst [vmem:[#allocation2 + $0xf0] sm:$0xff] %v318
  %323 = vst [vmem:[#allocation2 + $0xf8] sm:$0xff] %v319
  %324 = vrot.lane.b32.xlu0 %v15, 111
  %v325 = vpop.permute.xlu0 %324
  %326 = vrot.lane.b32.xlu0 %v16, 111
  %v327 = vpop.permute.xlu0 %326
  %328 = vrot.lane.b32.xlu0 %v17, 111
  %v329 = vpop.permute.xlu0 %328
  %330 = vrot.lane.b32.xlu0 %v18, 111
  %v331 = vpop.permute.xlu0 %330
  %vm332 = vcmp.lt.s32.totalorder %v36, 111
  %v333 = vsel %vm332, %v329, %v331
  %v334 = vsel %vm332, %v327, %v329
  %v335 = vsel %vm332, %v325, %v327
  %v336 = vsel %vm332, %v331, %v325
  %vm337 = vmand %vm275, %vm140
  %vm338 = vmand %vm276, %vm141
  %vm339 = vmand %vm277, %vm142
  %vm340 = vmand %vm278, %vm143
  %vm341 = vmand %vm337, %vm148
  %vm342 = vmand %vm338, %vm149
  %vm343 = vmand %vm339, %vm150
  %vm344 = vmand %vm340, %vm151
  %v345 = vsel %vm341, %v335, 0.0
  %v346 = vsel %vm342, %v334, 0.0
  %v347 = vsel %vm343, %v333, 0.0
  %v348 = vsel %vm344, %v336, 0.0
  %349 = vst [vmem:[#allocation2 + $0x100] sm:$0xff] %v345
  %350 = vst [vmem:[#allocation2 + $0x108] sm:$0xff] %v346
  %351 = vst [vmem:[#allocation2 + $0x110] sm:$0xff] %v347
  %352 = vst [vmem:[#allocation2 + $0x118] sm:$0xff] %v348
  %v353 = vld [vmem:[%s2] sm:$0xf]
  %v354 = vld [vmem:[%s2 + $0x4] sm:$0xf]
  %v355 = vld [vmem:[#allocation2] sm:$0xff]
  %v356 = vld [vmem:[#allocation2 + $0x8] sm:$0xff]
  %v357 = vld [vmem:[#allocation2 + $0x10] sm:$0xff]
  %v358 = vld [vmem:[#allocation2 + $0x18] sm:$0xff]
  %v359 = vld [vmem:[#allocation2 + $0x20] sm:$0xff]
  %v360 = vld [vmem:[#allocation2 + $0x28] sm:$0xff]
  %v361 = vld [vmem:[#allocation2 + $0x30] sm:$0xff]
  %v362 = vld [vmem:[#allocation2 + $0x38] sm:$0xff]
  %v363 = vld [vmem:[#allocation2 + $0x40] sm:$0xff]
  %v364 = vld [vmem:[#allocation2 + $0x48] sm:$0xff]
  %v365 = vld [vmem:[#allocation2 + $0x50] sm:$0xff]
  %v366 = vld [vmem:[#allocation2 + $0x58] sm:$0xff]
  %v367 = vld [vmem:[#allocation2 + $0x60] sm:$0xff]
  %v368 = vld [vmem:[#allocation2 + $0x68] sm:$0xff]
  %v369 = vld [vmem:[#allocation2 + $0x70] sm:$0xff]
  %v370 = vld [vmem:[#allocation2 + $0x78] sm:$0xff]
  %v371 = vld [vmem:[#allocation2 + $0x80] sm:$0xff]
  %v372 = vld [vmem:[#allocation2 + $0x88] sm:$0xff]
  %v373 = vld [vmem:[#allocation2 + $0x90] sm:$0xff]
  %v374 = vld [vmem:[#allocation2 + $0x98] sm:$0xff]
  %v375 = vld [vmem:[#allocation2 + $0xa0] sm:$0xff]
  %v376 = vld [vmem:[#allocation2 + $0xa8] sm:$0xff]
  %v377 = vld [vmem:[#allocation2 + $0xb0] sm:$0xff]
  %v378 = vld [vmem:[#allocation2 + $0xb8] sm:$0xff]
  %v379 = vld [vmem:[#allocation2 + $0xc0] sm:$0xff]
  %v380 = vld [vmem:[#allocation2 + $0xc8] sm:$0xff]
  %v381 = vld [vmem:[#allocation2 + $0xd0] sm:$0xff]
  %v382 = vld [vmem:[#allocation2 + $0xd8] sm:$0xff]
  %v383 = vld [vmem:[#allocation2 + $0xe0] sm:$0xff]
  %v384 = vld [vmem:[#allocation2 + $0xe8] sm:$0xff]
  %v385 = vld [vmem:[#allocation2 + $0xf0] sm:$0xff]
  %v386 = vld [vmem:[#allocation2 + $0xf8] sm:$0xff]
  %v387 = vld [vmem:[#allocation2 + $0x100] sm:$0xff]
  %v388 = vld [vmem:[#allocation2 + $0x108] sm:$0xff]
  %v389 = vld [vmem:[#allocation2 + $0x110] sm:$0xff]
  %v390 = vld [vmem:[#allocation2 + $0x118] sm:$0xff]
  %v391 = vpack.c.bf16 %v359, %v355
  %v392 = vpack.c.bf16 %v360, %v356
  %v393 = vpack.c.bf16 %v361, %v357
  %v394 = vpack.c.bf16 %v362, %v358
  %v395 = vpack.c.bf16 %v367, %v363
  %v396 = vpack.c.bf16 %v368, %v364
  %v397 = vpack.c.bf16 %v369, %v365
  %v398 = vpack.c.bf16 %v370, %v366
  %v399 = vpack.c.bf16 %v375, %v371
  %v400 = vpack.c.bf16 %v376, %v372
  %v401 = vpack.c.bf16 %v377, %v373
  %v402 = vpack.c.bf16 %v378, %v374
  %v403 = vpack.c.bf16 %v383, %v379
  %v404 = vpack.c.bf16 %v384, %v380
  %v405 = vpack.c.bf16 %v385, %v381
  %v406 = vpack.c.bf16 %v386, %v382
  %v407 = vpack.c.bf16 %v387, %v387
  %v408 = vpack.c.bf16 %v388, %v388
  %v409 = vpack.c.bf16 %v389, %v389
  %v410 = vpack.c.bf16 %v390, %v390
  %v413 = vunpack.c.l.b16 %v353
  %v414 = vunpack.c.l.b16 %v354
  %v415 = vpack.c.b16 %v414, %v413
  %vm416 = vcmask 588800
  %v418 = vsel %vm416, %v415, 0
  %vm420 = vcmask 1043456
  %v422 = vsel %vm420, %v407, 0
  %v425 = vsel %vm420, %v408, 0
  %v428 = vsel %vm420, %v409, 0
  %v431 = vsel %vm420, %v410, 0
  %433 = vmatpush.bf16.msra.mxu0 0
  %434 = vmatpush.bf16.msra.mxu0 0
  %435 = vmatpush.bf16.msra.mxu0 0
  %436 = vmatpush.bf16.msra.mxu0 %v422
  %437 = vmatpush.bf16.msra.mxu0 %v403
  %438 = vmatpush.bf16.msra.mxu0 %v399
  %439 = vmatpush.bf16.msra.mxu0 %v395
  %440 = vmatpush.bf16.msra.mxu0 %v391
  %441 = vmatmul.bf16.gmra.mxu0 %v418
  %v442 = vpop.f32.mrf.mxu0
  %v443 = vadd.f32 0.0, %v442
  %v444 = vpop.f32.mrf.mxu0
  %v445 = vadd.f32 0.0, %v444
  %446 = vdwg.mxu0
  %447 = vmatpush.bf16.msra.mxu0 0
  %448 = vmatpush.bf16.msra.mxu0 0
  %449 = vmatpush.bf16.msra.mxu0 0
  %450 = vmatpush.bf16.msra.mxu0 %v425
  %451 = vmatpush.bf16.msra.mxu0 %v404
  %452 = vmatpush.bf16.msra.mxu0 %v400
  %453 = vmatpush.bf16.msra.mxu0 %v396
  %454 = vmatpush.bf16.msra.mxu0 %v392
  %455 = vmatmul.bf16.gmra.mxu0 %v418
  %v456 = vpop.f32.mrf.mxu0
  %v457 = vadd.f32 0.0, %v456
  %v458 = vpop.f32.mrf.mxu0
  %v459 = vadd.f32 0.0, %v458
  %460 = vdwg.mxu0
  %461 = vmatpush.bf16.msra.mxu0 0
  %462 = vmatpush.bf16.msra.mxu0 0
  %463 = vmatpush.bf16.msra.mxu0 0
  %464 = vmatpush.bf16.msra.mxu0 %v428
  %465 = vmatpush.bf16.msra.mxu0 %v405
  %466 = vmatpush.bf16.msra.mxu0 %v401
  %467 = vmatpush.bf16.msra.mxu0 %v397
  %468 = vmatpush.bf16.msra.mxu0 %v393
  %469 = vmatmul.bf16.gmra.mxu0 %v418
  %v470 = vpop.f32.mrf.mxu0
  %v471 = vadd.f32 0.0, %v470
  %v472 = vpop.f32.mrf.mxu0
  %v473 = vadd.f32 0.0, %v472
  %474 = vdwg.mxu0
  %475 = vmatpush.bf16.msra.mxu0 0
  %476 = vmatpush.bf16.msra.mxu0 0
  %477 = vmatpush.bf16.msra.mxu0 0
  %478 = vmatpush.bf16.msra.mxu0 %v431
  %479 = vmatpush.bf16.msra.mxu0 %v406
  %480 = vmatpush.bf16.msra.mxu0 %v402
  %481 = vmatpush.bf16.msra.mxu0 %v398
  %482 = vmatpush.bf16.msra.mxu0 %v394
  %483 = vmatmul.bf16.gmra.mxu0 %v418
  %v484 = vpop.f32.mrf.mxu0
  %v485 = vadd.f32 0.0, %v484
  %v486 = vpop.f32.mrf.mxu0
  %v487 = vadd.f32 0.0, %v486
  %488 = vdwg.mxu0
  %489 = vst [vmem:[%s3] sm:$0xff] %v443
  %490 = vst [vmem:[%s3 + $0x8] sm:$0xff] %v457
  %491 = vst [vmem:[%s3 + $0x10] sm:$0xff] %v471
  %492 = vst [vmem:[%s3 + $0x18] sm:$0xff] %v485
  %493 = vst [vmem:[%s3 + $0x20] sm:$0xff] %v445
  %494 = vst [vmem:[%s3 + $0x28] sm:$0xff] %v459
  %495 = vst [vmem:[%s3 + $0x30] sm:$0xff] %v473
  %496 = vst [vmem:[%s3 + $0x38] sm:$0xff] %v487
  // Predicated region
  $region14: #{basenet_conv1.1} parent=0 // pred_check
    _
  $region15: #{basenet_conv1.1} parent=0 // pred_check_branch
    %498 = sbr.rel (0) target = $region17
  $region16: #{basenet_conv1.1} parent=0 // pred_region
    _
  $region17: #{basenet_conv1.1} parent=0 // pred_fallthru
    _
  // Predicated region
  $region18: #{basenet_conv1.1} parent=0 // pred_check
    _
  $region19: #{basenet_conv1.1} parent=0 // pred_check_branch
    %500 = sbr.rel (0) target = $region21
  $region20: #{basenet_conv1.1} parent=0 // pred_region
    _
  $region21: #{basenet_conv1.1} parent=0 // pred_fallthru
    _

</llo_original>
